<compile_context>
chip_gen: v7x
topology: tpu7x:2x2x1
jax: 0.10.0
libtpu: 0.0.40
codegen_flags: <defaults>
</compile_context>

<pallas_src>
import math

import jax
import jax.numpy as jnp
from jax import lax
from jax.experimental import pallas as pl
from jax.experimental.pallas import tpu as pltpu

LOG_2PI = math.log(2.0 * math.pi)


def _choose_layout(T, B, D, max_lanes=32768):
    """Pick a lane-dense 2D view (R, C) of the flat [T, B, D] data.

    Folds g timesteps into the lane dim so C = g*B*D is a multiple of 128 when
    possible.  Pure reshape of contiguous time-major data -> no copy."""
    BD = B * D
    if BD % 128 == 0 or BD > max_lanes:
        return T, BD
    for g in range(2, min(T, 128) + 1):
        if T % g == 0 and (g * BD) % 128 == 0 and g * BD <= max_lanes:
            return T // g, g * BD
    return T, BD          # fall back: full-width blocks, lanes padded to 128


def _vmem_plan():
    """(per-stream block byte budget, vmem_limit_bytes), generation-aware.

    ~7 f32 streams x 2 buffers + int8 mask + accumulators ~= 14.5 block-sized
    buffers, so cap//40 per block keeps the footprint well under cap//2 on
    v5e/v6e (128 MiB) and v7x (64 MiB per TensorCore)."""
    cap = 64 << 20        # conservative default if the query is unavailable
    try:
        cap = int(getattr(pltpu.get_tpu_info(), "vmem_capacity_bytes", cap))
    except Exception:
        pass
    return max(256 << 10, cap // 40), cap // 2


def _plan_rows(R, C, block_bytes):
    """Rows per block: multiple of 8 (32 when that lets the int8 mask tile
    natively), sized to the VMEM budget, and always >= 2 blocks when there is
    enough work to split across both v7x TensorCores."""
    max_rows = max(8, (block_bytes // (4 * C)) // 8 * 8)
    if R <= 16:
        return R, 1                           # single full-extent block
    align = 32 if R >= 64 else 8
    row_blk = min(max_rows, max(align, (R // 2) // align * align))
    return row_blk, -(-R // row_blk)


def _make_vrnn_loss_kernel(row_blk, n_inner, n_rows, ragged):
    """KLD + masked-MVN-NLL partial sums over lane-dense (row_blk, C) blocks."""

    def kernel(enc_mean_ref, enc_std_ref, prior_mean_ref, prior_std_ref,
               x_ref, dec_mean_ref, dec_std_ref, msk_ref,
               kld_out_ref, nll_out_ref, kld_acc, nll_acc):
        c = pl.program_id(0)
        i = pl.program_id(1)

        @pl.when(i == 0)
        def _():
            kld_acc[...] = jnp.zeros_like(kld_acc)
            nll_acc[...] = jnp.zeros_like(nll_acc)

        f32 = jnp.float32

        # _kld_gauss elementwise term (the "std" args are log-variances,
        # exactly as in the PyTorch code);  '/ exp(ps)' written as '* exp(-ps)'.
        es = enc_std_ref[...].astype(f32)
        ps = prior_std_ref[...].astype(f32)
        dm = enc_mean_ref[...].astype(f32) - prior_mean_ref[...].astype(f32)
        kld = ps - es + (jnp.exp(es) + dm * dm) * jnp.exp(-ps) - 1.0

        # Masked MultivariateNormal(mu, diag(exp(0.5*dec_std*msk))) NLL
        # pieces; the 0.5 factor and the D*log(2*pi) constant are applied in
        # the wrapper (they do not depend on the data).
        m = msk_ref[...].astype(f32)
        log_v = 0.5 * dec_std_ref[...].astype(f32) * m
        diff = m * (x_ref[...].astype(f32) - dec_mean_ref[...].astype(f32))
        nll = log_v + diff * diff * jnp.exp(-log_v)

        if ragged:
            # Rows past the logical end (ragged last block / padding grid
            # steps re-reading a clamped block) hold stale VMEM; zero their
            # contribution before reducing.
            start = (c * n_inner + i) * row_blk
            row_ids = start + lax.broadcasted_iota(jnp.int32, kld.shape, 0)
            valid = row_ids < n_rows
            kld = jnp.where(valid, kld, 0.0)
            nll = jnp.where(valid, nll, 0.0)

        kld_acc[...] += jnp.sum(kld)
        nll_acc[...] += jnp.sum(nll)

        @pl.when(i == pl.num_programs(1) - 1)
        def _():
            # Every lane of the (1, 128) accumulator already holds the
            # group's total; the wrapper reads lane 0 of each group.
            kld_out_ref[...] = kld_acc[...]
            nll_out_ref[...] = nll_acc[...]

    return kernel


def vrnn_loss(all_prior_mean, all_prior_std, all_x, all_enc_mean, all_enc_std,
              all_dec_mean, all_dec_std, msk, eval_x, eval_msk,
              beta=1.0, lambda1=0.1, isreconmsk=True,
              assume_binary_mask=True):
    """Pallas implementation of VRNNLoss.forward (isreconmsk=True path).

    all_* tensors: [T, B, D];  msk / eval_x / eval_msk: [B, T, D] (PyTorch
    order).  lambda1 is stored but never used by the PyTorch forward; the MAE
    term never reaches the returned loss when isreconmsk=True, so eval_x and
    eval_msk are accepted for API parity but not read.  assume_binary_mask
    allows the 0/1 missing-value mask to travel as int8."""
    # TODO(synk): isreconmsk=False branch (unmasked Normal NLL + MAE in the loss) not implemented.
    assert isreconmsk, "only the default isreconmsk=True path is implemented"
    del lambda1, eval_x, eval_msk

    T, B, D = all_x.shape
    N = T * B * D
    R, C = _choose_layout(T, B, D)
    block_bytes, vmem_limit = _vmem_plan()
    row_blk, n_blocks = _plan_rows(R, C, block_bytes)
    n_par = 2 if n_blocks >= 2 else 1
    n_inner = -(-n_blocks // n_par)
    ragged = (R % row_blk != 0) or (n_par * n_inner != n_blocks)
    use_i8_mask = assume_binary_mask and row_blk % 32 == 0 and C % 128 == 0

    # Free reshapes of the contiguous time-major streams.
    streams = [a.reshape(R, C) for a in
               (all_enc_mean, all_enc_std, all_prior_mean, all_prior_std,
                all_x, all_dec_mean, all_dec_std)]
    # One fused wrapper pass: cast (int8 when safe) + transpose to time-major.
    msk_dtype = jnp.int8 if use_i8_mask else all_x.dtype
    msk_flat = jnp.transpose(msk.astype(msk_dtype), (1, 0, 2)).reshape(R, C)

    last_blk = n_blocks - 1

    def in_map(c, i):
        blk = c * n_inner + i
        return (jnp.minimum(blk, last_blk), 0)   # clamp padding grid steps

    in_spec = pl.BlockSpec((row_blk, C), in_map)
    out_spec = pl.BlockSpec((1, 128), lambda c, i: (0, c))

    mask_bytes = N if use_i8_mask else 4 * N
    cost = pl.CostEstimate(flops=16 * N, transcendentals=3 * N,
                           bytes_accessed=7 * 4 * N + mask_bytes
                           + 2 * 4 * 128 * n_par)

    kld_part, nll_part = pl.pallas_call(
        _make_vrnn_loss_kernel(row_blk, n_inner, R, ragged),
        out_shape=(jax.ShapeDtypeStruct((1, 128 * n_par), jnp.float32),
                   jax.ShapeDtypeStruct((1, 128 * n_par), jnp.float32)),
        grid_spec=pltpu.PrefetchScalarGridSpec(
            num_scalar_prefetch=0,
            grid=(n_par, n_inner),
            in_specs=[in_spec] * 8,
            out_specs=(out_spec, out_spec),
            scratch_shapes=[pltpu.VMEM((1, 128), jnp.float32),
                            pltpu.VMEM((1, 128), jnp.float32)],
        ),
        compiler_params=pltpu.CompilerParams(
            dimension_semantics=("parallel", "arbitrary"),
            vmem_limit_bytes=vmem_limit),
        cost_estimate=cost,
    )(*streams, msk_flat)

    kld_sum = jnp.sum(kld_part.reshape(n_par, 128)[:, 0])
    nll_sum = jnp.sum(nll_part.reshape(n_par, 128)[:, 0])

    # kld_loss.mean() over the batch + nll_loss / B (len(kld_loss) == B),
    # including the MVN 0.5*D*log(2*pi) constant per (t, b).
    kld_term = beta * 0.5 * kld_sum / B
    nll_term = 0.5 * (nll_sum + T * B * D * LOG_2PI) / B
    return kld_term + nll_term


def vrnn_loss_ref(all_prior_mean, all_prior_std, all_x, all_enc_mean, all_enc_std,
                  all_dec_mean, all_dec_std, msk, eval_x, eval_msk, beta=1.0):
    """Pure-JAX reference mirroring the PyTorch forward (isreconmsk=True)."""
    T, B, D = all_x.shape
    msk_t = jnp.transpose(msk, (1, 0, 2)).astype(all_x.dtype)

    kld = (all_prior_std - all_enc_std
           + (jnp.exp(all_enc_std) + (all_enc_mean - all_prior_mean) ** 2)
           / jnp.exp(all_prior_std) - 1.0)
    kld_loss = beta * 0.5 * jnp.sum(kld, axis=(0, 2))                   # [B]

    mu = all_dec_mean * msk_t
    log_v = 0.5 * all_dec_std * msk_t                    # log of diag(cov)
    diff = all_x * msk_t - mu
    log_prob = -0.5 * (D * LOG_2PI
                       + jnp.sum(log_v + diff * diff * jnp.exp(-log_v), axis=2))
    nll_loss = -jnp.sum(log_prob)

    return jnp.mean(kld_loss) + nll_loss / B


if __name__ == "__main__":
    def run_case(key, T, B, D):
        keys = jax.random.split(key, 10)
        all_prior_mean = jax.random.normal(keys[0], (T, B, D), jnp.float32)
        all_prior_std = 0.5 * jax.random.normal(keys[1], (T, B, D), jnp.float32)
        all_x = jax.random.normal(keys[2], (T, B, D), jnp.float32)
        all_enc_mean = jax.random.normal(keys[3], (T, B, D), jnp.float32)
        all_enc_std = 0.5 * jax.random.normal(keys[4], (T, B, D), jnp.float32)
        all_dec_mean = jax.random.normal(keys[5], (T, B, D), jnp.float32)
        all_dec_std = 0.5 * jax.random.normal(keys[6], (T, B, D), jnp.float32)
        msk = jax.random.bernoulli(keys[7], 0.7, (B, T, D)).astype(jnp.float32)
        eval_x = jax.random.normal(keys[8], (B, T, D), jnp.float32)
        eval_msk = jax.random.bernoulli(keys[9], 0.5, (B, T, D)).astype(jnp.float32)

        loss = jax.block_until_ready(
            vrnn_loss(all_prior_mean, all_prior_std, all_x, all_enc_mean,
                      all_enc_std, all_dec_mean, all_dec_std, msk, eval_x,
                      eval_msk, beta=1.0, lambda1=0.1))
        ref = jax.block_until_ready(
            vrnn_loss_ref(all_prior_mean, all_prior_std, all_x, all_enc_mean,
                          all_enc_std, all_dec_mean, all_dec_std, msk, eval_x,
                          eval_msk, beta=1.0))

        assert jnp.isfinite(loss), f"non-finite loss: {loss}"
        assert jnp.allclose(loss, ref, rtol=2e-4, atol=1e-3), (T, B, D, loss, ref)

    key0, key1, key2 = jax.random.split(jax.random.PRNGKey(0), 3)
    run_case(key0, 8, 4, 16)    # single full-extent block, lanes folded to 128
    run_case(key1, 160, 4, 16)  # multi-block, int8 mask, ragged 2-way parallel grid
    run_case(key2, 12, 3, 10)   # odd dims: lane fallback (C=30), f32 mask
    print("KERNEL_OK")
</pallas_src>

<mosaic_0001>
module attributes {stable_mosaic.version = 11 : i64} {
  func.func @kernel(%arg0: i32, %arg1: i32, %arg2: memref<4x128xf32, #tpu.memory_space<vmem>>, %arg3: memref<4x128xf32, #tpu.memory_space<vmem>>, %arg4: memref<4x128xf32, #tpu.memory_space<vmem>>, %arg5: memref<4x128xf32, #tpu.memory_space<vmem>>, %arg6: memref<4x128xf32, #tpu.memory_space<vmem>>, %arg7: memref<4x128xf32, #tpu.memory_space<vmem>>, %arg8: memref<4x128xf32, #tpu.memory_space<vmem>>, %arg9: memref<4x128xf32, #tpu.memory_space<vmem>>, %arg10: memref<1x128xf32, #tpu.memory_space<vmem>>, %arg11: memref<1x128xf32, #tpu.memory_space<vmem>>, %arg12: memref<1x128xf32, #tpu.memory_space<vmem>>, %arg13: memref<1x128xf32, #tpu.memory_space<vmem>>) attributes {dimension_semantics = [#tpu.dimension_semantics<parallel>, #tpu.dimension_semantics<arbitrary>], iteration_bounds = array<i64: 1, 1>, scalar_prefetch = 0 : i64, scratch_operands = 2 : i64, tpu.core_type = #tpu.core_type<tc>, window_params = [{transform_indices = @transform_0, window_bounds = array<i64: 4, 128>}, {transform_indices = @transform_1, window_bounds = array<i64: 4, 128>}, {transform_indices = @transform_2, window_bounds = array<i64: 4, 128>}, {transform_indices = @transform_3, window_bounds = array<i64: 4, 128>}, {transform_indices = @transform_4, window_bounds = array<i64: 4, 128>}, {transform_indices = @transform_5, window_bounds = array<i64: 4, 128>}, {transform_indices = @transform_6, window_bounds = array<i64: 4, 128>}, {transform_indices = @transform_7, window_bounds = array<i64: 4, 128>}, {transform_indices = @transform_8, window_bounds = array<i64: 1, 128>}, {transform_indices = @transform_9, window_bounds = array<i64: 1, 128>}]} {
    %c0_i32 = arith.constant 0 : i32
    %0 = arith.cmpi eq, %arg1, %c0_i32 : i32
    %1 = arith.extui %0 : i1 to i32
    %c0_i32_0 = arith.constant 0 : i32
    %2 = arith.cmpi ne, %1, %c0_i32_0 : i32
    scf.if %2 {
      %cst_31 = arith.constant 0.000000e+00 : f32
      %53 = vector.broadcast %cst_31 : f32 to vector<1x128xf32>
      %c0_32 = arith.constant 0 : index
      %c0_33 = arith.constant 0 : index
      %54 = vector.load %arg12[%c0_32, %c0_33] : memref<1x128xf32, #tpu.memory_space<vmem>>, vector<1x128xf32>
      tpu.vector_store %arg12[%c0_32, %c0_33], %53 {strides = array<i32>} : memref<1x128xf32, #tpu.memory_space<vmem>>, vector<1x128xf32>,
      %cst_34 = arith.constant 0.000000e+00 : f32
      %55 = vector.broadcast %cst_34 : f32 to vector<1x128xf32>
      %c0_35 = arith.constant 0 : index
      %c0_36 = arith.constant 0 : index
      %56 = vector.load %arg13[%c0_35, %c0_36] : memref<1x128xf32, #tpu.memory_space<vmem>>, vector<1x128xf32>
      tpu.vector_store %arg13[%c0_35, %c0_36], %55 {strides = array<i32>} : memref<1x128xf32, #tpu.memory_space<vmem>>, vector<1x128xf32>,
    } else {
    }
    %c0 = arith.constant 0 : index
    %c0_1 = arith.constant 0 : index
    %3 = vector.load %arg3[%c0, %c0_1] : memref<4x128xf32, #tpu.memory_space<vmem>>, vector<4x128xf32>
    %c0_2 = arith.constant 0 : index
    %c0_3 = arith.constant 0 : index
    %4 = vector.load %arg5[%c0_2, %c0_3] : memref<4x128xf32, #tpu.memory_space<vmem>>, vector<4x128xf32>
    %c0_4 = arith.constant 0 : index
    %c0_5 = arith.constant 0 : index
    %5 = vector.load %arg2[%c0_4, %c0_5] : memref<4x128xf32, #tpu.memory_space<vmem>>, vector<4x128xf32>
    %c0_6 = arith.constant 0 : index
    %c0_7 = arith.constant 0 : index
    %6 = vector.load %arg4[%c0_6, %c0_7] : memref<4x128xf32, #tpu.memory_space<vmem>>, vector<4x128xf32>
    %7 = arith.subf %5, %6 : vector<4x128xf32>
    %8 = arith.subf %4, %3 : vector<4x128xf32>
    %9 = math.exp %3 : vector<4x128xf32>
    %10 = arith.mulf %7, %7 : vector<4x128xf32>
    %11 = arith.addf %9, %10 : vector<4x128xf32>
    %cst = arith.constant 0.000000e+00 : f32
    %12 = vector.broadcast %cst : f32 to vector<4x128xf32>
    %13 = arith.subf %12, %4 : vector<4x128xf32>
    %14 = math.exp %13 : vector<4x128xf32>
    %15 = arith.mulf %11, %14 : vector<4x128xf32>
    %16 = arith.addf %8, %15 : vector<4x128xf32>
    %cst_8 = arith.constant 1.000000e+00 : f32
    %17 = vector.broadcast %cst_8 : f32 to vector<4x128xf32>
    %18 = arith.subf %16, %17 : vector<4x128xf32>
    %c0_9 = arith.constant 0 : index
    %c0_10 = arith.constant 0 : index
    %19 = vector.load %arg9[%c0_9, %c0_10] : memref<4x128xf32, #tpu.memory_space<vmem>>, vector<4x128xf32>
    %c0_11 = arith.constant 0 : index
    %c0_12 = arith.constant 0 : index
    %20 = vector.load %arg8[%c0_11, %c0_12] : memref<4x128xf32, #tpu.memory_space<vmem>>, vector<4x128xf32>
    %cst_13 = arith.constant 5.000000e-01 : f32
    %21 = vector.broadcast %cst_13 : f32 to vector<4x128xf32>
    %22 = arith.mulf %21, %20 : vector<4x128xf32>
    %23 = arith.mulf %22, %19 : vector<4x128xf32>
    %c0_14 = arith.constant 0 : index
    %c0_15 = arith.constant 0 : index
    %24 = vector.load %arg6[%c0_14, %c0_15] : memref<4x128xf32, #tpu.memory_space<vmem>>, vector<4x128xf32>
    %c0_16 = arith.constant 0 : index
    %c0_17 = arith.constant 0 : index
    %25 = vector.load %arg7[%c0_16, %c0_17] : memref<4x128xf32, #tpu.memory_space<vmem>>, vector<4x128xf32>
    %26 = arith.subf %24, %25 : vector<4x128xf32>
    %27 = arith.mulf %19, %26 : vector<4x128xf32>
    %28 = arith.mulf %27, %27 : vector<4x128xf32>
    %cst_18 = arith.constant 0.000000e+00 : f32
    %29 = vector.broadcast %cst_18 : f32 to vector<4x128xf32>
    %30 = arith.subf %29, %23 : vector<4x128xf32>
    %31 = math.exp %30 : vector<4x128xf32>
    %32 = arith.mulf %28, %31 : vector<4x128xf32>
    %33 = arith.addf %23, %32 : vector<4x128xf32>
    %c0_19 = arith.constant 0 : index
    %c0_20 = arith.constant 0 : index
    %34 = vector.load %arg12[%c0_19, %c0_20] : memref<1x128xf32, #tpu.memory_space<vmem>>, vector<1x128xf32>
    %35 = vector.shape_cast %18 : vector<4x128xf32> to vector<1x4x128xf32>
    %cst_21 = arith.constant dense<0.000000e+00> : vector<1xf32>
    %36 = vector.multi_reduction <add>, %35, %cst_21 [1, 2] : vector<1x4x128xf32> to vector<1xf32>
    %37 = vector.shape_cast %36 : vector<1xf32> to vector<1x1x1xf32>
    %38 = vector.extract %37[0, 0, 0] : f32 from vector<1x1x1xf32>
    %39 = vector.broadcast %38 : f32 to vector<1x128xf32>
    %40 = arith.addf %34, %39 : vector<1x128xf32>
    %c0_22 = arith.constant 0 : index
    %c0_23 = arith.constant 0 : index
    %41 = vector.load %arg12[%c0_22, %c0_23] : memref<1x128xf32, #tpu.memory_space<vmem>>, vector<1x128xf32>
    tpu.vector_store %arg12[%c0_22, %c0_23], %40 {strides = array<i32>} : memref<1x128xf32, #tpu.memory_space<vmem>>, vector<1x128xf32>,
    %c0_24 = arith.constant 0 : index
    %c0_25 = arith.constant 0 : index
    %42 = vector.load %arg13[%c0_24, %c0_25] : memref<1x128xf32, #tpu.memory_space<vmem>>, vector<1x128xf32>
    %43 = vector.shape_cast %33 : vector<4x128xf32> to vector<1x4x128xf32>
    %cst_26 = arith.constant dense<0.000000e+00> : vector<1xf32>
    %44 = vector.multi_reduction <add>, %43, %cst_26 [1, 2] : vector<1x4x128xf32> to vector<1xf32>
    %45 = vector.shape_cast %44 : vector<1xf32> to vector<1x1x1xf32>
    %46 = vector.extract %45[0, 0, 0] : f32 from vector<1x1x1xf32>
    %47 = vector.broadcast %46 : f32 to vector<1x128xf32>
    %48 = arith.addf %42, %47 : vector<1x128xf32>
    %c0_27 = arith.constant 0 : index
    %c0_28 = arith.constant 0 : index
    %49 = vector.load %arg13[%c0_27, %c0_28] : memref<1x128xf32, #tpu.memory_space<vmem>>, vector<1x128xf32>
    tpu.vector_store %arg13[%c0_27, %c0_28], %48 {strides = array<i32>} : memref<1x128xf32, #tpu.memory_space<vmem>>, vector<1x128xf32>,
    %c0_i32_29 = arith.constant 0 : i32
    %50 = arith.cmpi eq, %arg1, %c0_i32_29 : i32
    %51 = arith.extui %50 : i1 to i32
    %c0_i32_30 = arith.constant 0 : i32
    %52 = arith.cmpi ne, %51, %c0_i32_30 : i32
    scf.if %52 {
      %c0_31 = arith.constant 0 : index
      %c0_32 = arith.constant 0 : index
      %53 = vector.load %arg12[%c0_31, %c0_32] : memref<1x128xf32, #tpu.memory_space<vmem>>, vector<1x128xf32>
      %c0_33 = arith.constant 0 : index
      %c0_34 = arith.constant 0 : index
      %54 = vector.load %arg10[%c0_33, %c0_34] : memref<1x128xf32, #tpu.memory_space<vmem>>, vector<1x128xf32>
      tpu.vector_store %arg10[%c0_33, %c0_34], %53 {strides = array<i32>} : memref<1x128xf32, #tpu.memory_space<vmem>>, vector<1x128xf32>,
      %c0_35 = arith.constant 0 : index
      %c0_36 = arith.constant 0 : index
      %55 = vector.load %arg13[%c0_35, %c0_36] : memref<1x128xf32, #tpu.memory_space<vmem>>, vector<1x128xf32>
      %c0_37 = arith.constant 0 : index
      %c0_38 = arith.constant 0 : index
      %56 = vector.load %arg11[%c0_37, %c0_38] : memref<1x128xf32, #tpu.memory_space<vmem>>, vector<1x128xf32>
      tpu.vector_store %arg11[%c0_37, %c0_38], %55 {strides = array<i32>} : memref<1x128xf32, #tpu.memory_space<vmem>>, vector<1x128xf32>,
    } else {
    }
    return
  }
  func.func @transform_0(%arg0: i32, %arg1: i32) -> (i32, i32) {
    %c1_i32 = arith.constant 1 : i32
    %0 = arith.muli %arg0, %c1_i32 : i32
    %1 = arith.addi %0, %arg1 : i32
    %c0_i32 = arith.constant 0 : i32
    %2 = arith.minsi %1, %c0_i32 : i32
    %c0_i32_0 = arith.constant 0 : i32
    %c0_i32_1 = arith.constant 0 : i32
    return %2, %c0_i32_0 : i32, i32
  }
  func.func @transform_1(%arg0: i32, %arg1: i32) -> (i32, i32) {
    %c1_i32 = arith.constant 1 : i32
    %0 = arith.muli %arg0, %c1_i32 : i32
    %1 = arith.addi %0, %arg1 : i32
    %c0_i32 = arith.constant 0 : i32
    %2 = arith.minsi %1, %c0_i32 : i32
    %c0_i32_0 = arith.constant 0 : i32
    %c0_i32_1 = arith.constant 0 : i32
    return %2, %c0_i32_0 : i32, i32
  }
  func.func @transform_2(%arg0: i32, %arg1: i32) -> (i32, i32) {
    %c1_i32 = arith.constant 1 : i32
    %0 = arith.muli %arg0, %c1_i32 : i32
    %1 = arith.addi %0, %arg1 : i32
    %c0_i32 = arith.constant 0 : i32
    %2 = arith.minsi %1, %c0_i32 : i32
    %c0_i32_0 = arith.constant 0 : i32
    %c0_i32_1 = arith.constant 0 : i32
    return %2, %c0_i32_0 : i32, i32
  }
  func.func @transform_3(%arg0: i32, %arg1: i32) -> (i32, i32) {
    %c1_i32 = arith.constant 1 : i32
    %0 = arith.muli %arg0, %c1_i32 : i32
    %1 = arith.addi %0, %arg1 : i32
    %c0_i32 = arith.constant 0 : i32
    %2 = arith.minsi %1, %c0_i32 : i32
    %c0_i32_0 = arith.constant 0 : i32
    %c0_i32_1 = arith.constant 0 : i32
    return %2, %c0_i32_0 : i32, i32
  }
  func.func @transform_4(%arg0: i32, %arg1: i32) -> (i32, i32) {
    %c1_i32 = arith.constant 1 : i32
    %0 = arith.muli %arg0, %c1_i32 : i32
    %1 = arith.addi %0, %arg1 : i32
    %c0_i32 = arith.constant 0 : i32
    %2 = arith.minsi %1, %c0_i32 : i32
    %c0_i32_0 = arith.constant 0 : i32
    %c0_i32_1 = arith.constant 0 : i32
    return %2, %c0_i32_0 : i32, i32
  }
  func.func @transform_5(%arg0: i32, %arg1: i32) -> (i32, i32) {
    %c1_i32 = arith.constant 1 : i32
    %0 = arith.muli %arg0, %c1_i32 : i32
    %1 = arith.addi %0, %arg1 : i32
    %c0_i32 = arith.constant 0 : i32
    %2 = arith.minsi %1, %c0_i32 : i32
    %c0_i32_0 = arith.constant 0 : i32
    %c0_i32_1 = arith.constant 0 : i32
    return %2, %c0_i32_0 : i32, i32
  }
  func.func @transform_6(%arg0: i32, %arg1: i32) -> (i32, i32) {
    %c1_i32 = arith.constant 1 : i32
    %0 = arith.muli %arg0, %c1_i32 : i32
    %1 = arith.addi %0, %arg1 : i32
    %c0_i32 = arith.constant 0 : i32
    %2 = arith.minsi %1, %c0_i32 : i32
    %c0_i32_0 = arith.constant 0 : i32
    %c0_i32_1 = arith.constant 0 : i32
    return %2, %c0_i32_0 : i32, i32
  }
  func.func @transform_7(%arg0: i32, %arg1: i32) -> (i32, i32) {
    %c1_i32 = arith.constant 1 : i32
    %0 = arith.muli %arg0, %c1_i32 : i32
    %1 = arith.addi %0, %arg1 : i32
    %c0_i32 = arith.constant 0 : i32
    %2 = arith.minsi %1, %c0_i32 : i32
    %c0_i32_0 = arith.constant 0 : i32
    %c0_i32_1 = arith.constant 0 : i32
    return %2, %c0_i32_0 : i32, i32
  }
  func.func @transform_8(%arg0: i32, %arg1: i32) -> (i32, i32) {
    %c0_i32 = arith.constant 0 : i32
    %c0_i32_0 = arith.constant 0 : i32
    return %c0_i32, %arg0 : i32, i32
  }
  func.func @transform_9(%arg0: i32, %arg1: i32) -> (i32, i32) {
    %c0_i32 = arith.constant 0 : i32
    %c0_i32_0 = arith.constant 0 : i32
    return %c0_i32, %arg0 : i32, i32
  }
}

</mosaic_0001>

<llo_original>
// kernel: tpu_custom_call.1
$region0: #{tpu_custom_call.1}
  #allocation0 [shape = 'u32[]', space=smem, size = 0x4, offset = 0x4, fixed_abs, tag = 'smem constant byte address 0x4 - core index']
  #allocation1 [shape = 'u32[144,128]{1,0:T(1,128)}', space=vmem, size = 0x12000, scoped, tag = 'internal scratch']
  #allocation2 [shape = 'f32[1,128]{1,0:T(1,128)}', space=vmem, size = 0x200, scoped, tag = 'scratch operand']
  #allocation3 [shape = 'f32[1,128]{1,0:T(1,128)}', space=vmem, size = 0x200, scoped, tag = 'scratch operand']
  %s0 = inlined_call_operand.hbm [shape: f32[4,128], index: 0, kind: input, shape index: {}]
  %s1 = inlined_call_operand.hbm [shape: f32[4,128], index: 1, kind: input, shape index: {}]
  %s2 = inlined_call_operand.vmem [shape: f32[4,128], index: 2, kind: input, shape index: {}]
  %s3 = inlined_call_operand.vmem [shape: f32[4,128], index: 3, kind: input, shape index: {}]
  %s4 = inlined_call_operand.vmem [shape: f32[4,128], index: 4, kind: input, shape index: {}]
  %s5 = inlined_call_operand.vmem [shape: f32[4,128], index: 5, kind: input, shape index: {}]
  %s6 = inlined_call_operand.vmem [shape: f32[4,128], index: 6, kind: input, shape index: {}]
  %s7 = inlined_call_operand.vmem [shape: f32[4,128], index: 7, kind: input, shape index: {}]
  %s8 = inlined_call_operand.hbm [shape: f32[1,128], index: 8, kind: output, shape index: {0}]
  %s9 = inlined_call_operand.hbm [shape: f32[1,128], index: 9, kind: output, shape index: {1}]
  %10 = xla_tuple %s8, %s9
  %s11 = sld [smem:[#allocation0]]
  $region66: #{tpu_custom_call.1} parent=0
    _
  %s13 = ssub.s32 1, %s11
  %s14 = scalar_select 0, %s13, %s11
  $region1: #{tpu_custom_call.1} parent=0
    #allocation4 [shape = 'u8[2048]{0}', space=vmem, size = 0x800, scoped, tag = 'input window, operand 0, single buffered']
    #allocation5 [shape = 's32[1]{0}', space=sflag, size = 0x4, scoped, tag = 'scoped memory for tpu_custom_call.1']
    #allocation6 [shape = 's32[1]{0}', space=sflag, size = 0x4, scoped, tag = 'scoped memory for tpu_custom_call.1']
    #allocation7 [shape = 'u8[2048]{0}', space=vmem, size = 0x800, scoped, tag = 'input window, operand 1, single buffered']
    #allocation8 [shape = 's32[1]{0}', space=sflag, size = 0x4, scoped, tag = 'scoped memory for tpu_custom_call.1']
    #allocation9 [shape = 'u8[512]{0}', space=vmem, size = 0x400, scoped, tag = 'output window, operand 0, single buffered']
    #allocation10 [shape = 'u8[512]{0}', space=vmem, size = 0x400, scoped, tag = 'output window, operand 1, single buffered']
    #allocation11 [shape = 's32[1]{0}', space=sflag, size = 0x4, scoped, tag = 'scoped memory for tpu_custom_call.1']
    %15 = vsyncpa [#allocation5], 0
    %16 = vsyncpa [#allocation8], 0
    %17 = vsyncpa [#allocation6], 0
    %18 = vsyncpa [#allocation11], 0
    // Predicated region
    $region2: #{tpu_custom_call.1} parent=1 // pred_check
      _
    $region3: #{tpu_custom_call.1} parent=1 // pred_check_branch
      %20 = sbr.rel (0) target = $region5
    $region4: #{tpu_custom_call.1} parent=1 // pred_region
      %s21 = sadd.s32 0, 0
      %p22 = scmp.lt.s32.totalorder %s21, 0
      %s23 = scalar_select %p22, %s21, 0
      %s25 = ssub.s32 64, 64
      %26 = vsyncadd [#allocation5], %s25
      %s27 = smul.addr %s23, 64
      %s28 = scalar_lea.hbm %s0, %s27
      %s30 = sshll.u32 [#allocation4], 4
      %s31 = int_to_ptr.vmem [resolvable:$true] %s30
      %33 = dma.hbm_to_vmem [thread:$0]  %s28, 64, %s31, [#allocation5]
    $region5: #{tpu_custom_call.1} parent=1 // pred_fallthru
      _
    // Predicated region
    $region6: #{tpu_custom_call.1} parent=1 // pred_check
      _
    $region7: #{tpu_custom_call.1} parent=1 // pred_check_branch
      %35 = sbr.rel (0) target = $region9
    $region8: #{tpu_custom_call.1} parent=1 // pred_region
      %s36 = sadd.s32 0, 0
      %p37 = scmp.lt.s32.totalorder %s36, 0
      %s38 = scalar_select %p37, %s36, 0
      %s40 = ssub.s32 64, 64
      %41 = vsyncadd [#allocation8], %s40
      %s42 = smul.addr %s38, 64
      %s43 = scalar_lea.hbm %s1, %s42
      %s45 = sshll.u32 [#allocation7], 4
      %s46 = int_to_ptr.vmem [resolvable:$true] %s45
      %48 = dma.hbm_to_vmem [thread:$0]  %s43, 64, %s46, [#allocation8]
    $region9: #{tpu_custom_call.1} parent=1 // pred_fallthru
      _
    // Predicated region
    $region10: #{tpu_custom_call.1} parent=1 // pred_check
      _
    $region11: #{tpu_custom_call.1} parent=1 // pred_check_branch
      %50 = sbr.rel (0) target = $region13
    $region12: #{tpu_custom_call.1} parent=1 // pred_region
      %s51 = sadd.s32 0, 0
      %p52 = scmp.lt.s32.totalorder %s51, 0
      %s53 = scalar_select %p52, %s51, 0
      %p54 = scmp.lt.s32.totalorder %s53, 0
      %s55 = scalar_select %p54, %s53, 0
      %s56 = smul.addr %s55, 4
      %s57 = scalar_lea.vmem %s2, %s56
      %s58 = sadd.s32 0, 0
      %p59 = scmp.lt.s32.totalorder %s58, 0
      %s60 = scalar_select %p59, %s58, 0
    $region13: #{tpu_custom_call.1} parent=1 // pred_fallthru
      _
    // Predicated region
    $region14: #{tpu_custom_call.1} parent=1 // pred_check
      _
    $region15: #{tpu_custom_call.1} parent=1 // pred_check_branch
      %62 = sbr.rel (0) target = $region17
    $region16: #{tpu_custom_call.1} parent=1 // pred_region
      %s63 = sadd.s32 0, 0
      %p64 = scmp.lt.s32.totalorder %s63, 0
      %s65 = scalar_select %p64, %s63, 0
      %p66 = scmp.lt.s32.totalorder %s65, 0
      %s67 = scalar_select %p66, %s65, 0
      %s68 = smul.addr %s67, 4
      %s69 = scalar_lea.vmem %s3, %s68
      %s70 = sadd.s32 0, 0
      %p71 = scmp.lt.s32.totalorder %s70, 0
      %s72 = scalar_select %p71, %s70, 0
    $region17: #{tpu_custom_call.1} parent=1 // pred_fallthru
      _
    // Predicated region
    $region18: #{tpu_custom_call.1} parent=1 // pred_check
      _
    $region19: #{tpu_custom_call.1} parent=1 // pred_check_branch
      %74 = sbr.rel (0) target = $region21
    $region20: #{tpu_custom_call.1} parent=1 // pred_region
      %s75 = sadd.s32 0, 0
      %p76 = scmp.lt.s32.totalorder %s75, 0
      %s77 = scalar_select %p76, %s75, 0
      %p78 = scmp.lt.s32.totalorder %s77, 0
      %s79 = scalar_select %p78, %s77, 0
      %s80 = smul.addr %s79, 4
      %s81 = scalar_lea.vmem %s4, %s80
      %s82 = sadd.s32 0, 0
      %p83 = scmp.lt.s32.totalorder %s82, 0
      %s84 = scalar_select %p83, %s82, 0
    $region21: #{tpu_custom_call.1} parent=1 // pred_fallthru
      _
    // Predicated region
    $region22: #{tpu_custom_call.1} parent=1 // pred_check
      _
    $region23: #{tpu_custom_call.1} parent=1 // pred_check_branch
      %86 = sbr.rel (0) target = $region25
    $region24: #{tpu_custom_call.1} parent=1 // pred_region
      %s87 = sadd.s32 0, 0
      %p88 = scmp.lt.s32.totalorder %s87, 0
      %s89 = scalar_select %p88, %s87, 0
      %p90 = scmp.lt.s32.totalorder %s89, 0
      %s91 = scalar_select %p90, %s89, 0
      %s92 = smul.addr %s91, 4
      %s93 = scalar_lea.vmem %s5, %s92
      %s94 = sadd.s32 0, 0
      %p95 = scmp.lt.s32.totalorder %s94, 0
      %s96 = scalar_select %p95, %s94, 0
    $region25: #{tpu_custom_call.1} parent=1 // pred_fallthru
      _
    // Predicated region
    $region26: #{tpu_custom_call.1} parent=1 // pred_check
      _
    $region27: #{tpu_custom_call.1} parent=1 // pred_check_branch
      %98 = sbr.rel (0) target = $region29
    $region28: #{tpu_custom_call.1} parent=1 // pred_region
      %s99 = sadd.s32 0, 0
      %p100 = scmp.lt.s32.totalorder %s99, 0
      %s101 = scalar_select %p100, %s99, 0
      %p102 = scmp.lt.s32.totalorder %s101, 0
      %s103 = scalar_select %p102, %s101, 0
      %s104 = smul.addr %s103, 4
      %s105 = scalar_lea.vmem %s6, %s104
      %s106 = sadd.s32 0, 0
      %p107 = scmp.lt.s32.totalorder %s106, 0
      %s108 = scalar_select %p107, %s106, 0
    $region29: #{tpu_custom_call.1} parent=1 // pred_fallthru
      _
    // Predicated region
    $region30: #{tpu_custom_call.1} parent=1 // pred_check
      _
    $region31: #{tpu_custom_call.1} parent=1 // pred_check_branch
      %110 = sbr.rel (0) target = $region33
    $region32: #{tpu_custom_call.1} parent=1 // pred_region
      %s111 = sadd.s32 0, 0
      %p112 = scmp.lt.s32.totalorder %s111, 0
      %s113 = scalar_select %p112, %s111, 0
      %p114 = scmp.lt.s32.totalorder %s113, 0
      %s115 = scalar_select %p114, %s113, 0
      %s116 = smul.addr %s115, 4
      %s117 = scalar_lea.vmem %s7, %s116
      %s118 = sadd.s32 0, 0
      %p119 = scmp.lt.s32.totalorder %s118, 0
      %s120 = scalar_select %p119, %s118, 0
    $region33: #{tpu_custom_call.1} parent=1 // pred_fallthru
      _
    // Predicated region
    $region34: #{tpu_custom_call.1} parent=1 // pred_check
      _
    $region35: #{tpu_custom_call.1} parent=1 // pred_check_branch
      %122 = sbr.rel (0) target = $region37
    $region36: #{tpu_custom_call.1} parent=1 // pred_region
      %123 = dma.done [#allocation5], 64
    $region37: #{tpu_custom_call.1} parent=1 // pred_fallthru
      _
    // Predicated region
    $region38: #{tpu_custom_call.1} parent=1 // pred_check
      _
    $region39: #{tpu_custom_call.1} parent=1 // pred_check_branch
      %125 = sbr.rel (0) target = $region41
    $region40: #{tpu_custom_call.1} parent=1 // pred_region
      %126 = dma.done [#allocation8], 64
    $region41: #{tpu_custom_call.1} parent=1 // pred_fallthru
      _
    %s127 = sadd.s32 0, 0
    %p128 = scmp.lt.s32.totalorder %s127, 0
    %s129 = scalar_select %p128, %s127, 0
    %p130 = scmp.lt.s32.totalorder %s129, 0
    %s131 = scalar_select %p130, %s129, 0
    %s132 = smul.addr %s131, 4
    %s133 = scalar_lea.vmem %s2, %s132
    %s134 = sadd.s32 0, 0
    %p135 = scmp.lt.s32.totalorder %s134, 0
    %s136 = scalar_select %p135, %s134, 0
    %p137 = scmp.lt.s32.totalorder %s136, 0
    %s138 = scalar_select %p137, %s136, 0
    %s139 = smul.addr %s138, 4
    %s140 = scalar_lea.vmem %s3, %s139
    %s141 = sadd.s32 0, 0
    %p142 = scmp.lt.s32.totalorder %s141, 0
    %s143 = scalar_select %p142, %s141, 0
    %p144 = scmp.lt.s32.totalorder %s143, 0
    %s145 = scalar_select %p144, %s143, 0
    %s146 = smul.addr %s145, 4
    %s147 = scalar_lea.vmem %s4, %s146
    %s148 = sadd.s32 0, 0
    %p149 = scmp.lt.s32.totalorder %s148, 0
    %s150 = scalar_select %p149, %s148, 0
    %p151 = scmp.lt.s32.totalorder %s150, 0
    %s152 = scalar_select %p151, %s150, 0
    %s153 = smul.addr %s152, 4
    %s154 = scalar_lea.vmem %s5, %s153
    %s155 = sadd.s32 0, 0
    %p156 = scmp.lt.s32.totalorder %s155, 0
    %s157 = scalar_select %p156, %s155, 0
    %p158 = scmp.lt.s32.totalorder %s157, 0
    %s159 = scalar_select %p158, %s157, 0
    %s160 = smul.addr %s159, 4
    %s161 = scalar_lea.vmem %s6, %s160
    %s162 = sadd.s32 0, 0
    %p163 = scmp.lt.s32.totalorder %s162, 0
    %s164 = scalar_select %p163, %s162, 0
    %p165 = scmp.lt.s32.totalorder %s164, 0
    %s166 = scalar_select %p165, %s164, 0
    %s167 = smul.addr %s166, 4
    %s168 = scalar_lea.vmem %s7, %s167
    %s169 = sadd.s32 0, 0
    %p170 = scmp.lt.s32.totalorder %s169, 0
    %s171 = scalar_select %p170, %s169, 0
    %s172 = sadd.s32 0, 0
    %p173 = scmp.lt.s32.totalorder %s172, 0
    %s174 = scalar_select %p173, %s172, 0
    %s175 = sadd.s32 0, 0
    %p176 = scmp.lt.s32.totalorder %s175, 0
    %s177 = scalar_select %p176, %s175, 0
    %p178 = scmp.lt.s32.totalorder %s177, 0
    %s179 = scalar_select %p178, %s177, 0
    %s180 = smul.addr %s179, 4
    %s181 = scalar_lea.vmem %s2, %s180
    %s182 = sadd.s32 0, 0
    %p183 = scmp.lt.s32.totalorder %s182, 0
    %s184 = scalar_select %p183, %s182, 0
    %s185 = sadd.s32 0, 0
    %p186 = scmp.lt.s32.totalorder %s185, 0
    %s187 = scalar_select %p186, %s185, 0
    %p188 = scmp.lt.s32.totalorder %s187, 0
    %s189 = scalar_select %p188, %s187, 0
    %s190 = smul.addr %s189, 4
    %s191 = scalar_lea.vmem %s3, %s190
    %s192 = sadd.s32 0, 0
    %p193 = scmp.lt.s32.totalorder %s192, 0
    %s194 = scalar_select %p193, %s192, 0
    %s195 = sadd.s32 0, 0
    %p196 = scmp.lt.s32.totalorder %s195, 0
    %s197 = scalar_select %p196, %s195, 0
    %p198 = scmp.lt.s32.totalorder %s197, 0
    %s199 = scalar_select %p198, %s197, 0
    %s200 = smul.addr %s199, 4
    %s201 = scalar_lea.vmem %s4, %s200
    %s202 = sadd.s32 0, 0
    %p203 = scmp.lt.s32.totalorder %s202, 0
    %s204 = scalar_select %p203, %s202, 0
    %s205 = sadd.s32 0, 0
    %p206 = scmp.lt.s32.totalorder %s205, 0
    %s207 = scalar_select %p206, %s205, 0
    %p208 = scmp.lt.s32.totalorder %s207, 0
    %s209 = scalar_select %p208, %s207, 0
    %s210 = smul.addr %s209, 4
    %s211 = scalar_lea.vmem %s5, %s210
    %s212 = sadd.s32 0, 0
    %p213 = scmp.lt.s32.totalorder %s212, 0
    %s214 = scalar_select %p213, %s212, 0
    %s215 = sadd.s32 0, 0
    %p216 = scmp.lt.s32.totalorder %s215, 0
    %s217 = scalar_select %p216, %s215, 0
    %p218 = scmp.lt.s32.totalorder %s217, 0
    %s219 = scalar_select %p218, %s217, 0
    %s220 = smul.addr %s219, 4
    %s221 = scalar_lea.vmem %s6, %s220
    %s222 = sadd.s32 0, 0
    %p223 = scmp.lt.s32.totalorder %s222, 0
    %s224 = scalar_select %p223, %s222, 0
    %s225 = sadd.s32 0, 0
    %p226 = scmp.lt.s32.totalorder %s225, 0
    %s227 = scalar_select %p226, %s225, 0
    %p228 = scmp.lt.s32.totalorder %s227, 0
    %s229 = scalar_select %p228, %s227, 0
    %s230 = smul.addr %s229, 4
    %s231 = scalar_lea.vmem %s7, %s230
    %s232 = sadd.s32 0, 0
    %p233 = scmp.lt.s32.totalorder %s232, 0
    %s234 = scalar_select %p233, %s232, 0
    %p235 = scmp.eq.s32.totalorder 0, 0
    // Predicated region
    $region42: #{tpu_custom_call.1} parent=1 // pred_check
      %p236 = pneg %p235
    $region43: #{tpu_custom_call.1} parent=1 // pred_check_branch
      %238 = sbr.rel (%p236) target = $region45
    $region44: #{tpu_custom_call.1} parent=1 // pred_region
      %239 = vst [vmem:[#allocation2] sm:$0x1] 0.0
      %240 = vst [vmem:[#allocation3] sm:$0x1] 0.0
    $region45: #{tpu_custom_call.1} parent=1 // pred_fallthru
      _
    %v241 = vld [vmem:[#allocation7] sm:$0xf]
    %v242 = vld [vmem:[%s191] sm:$0xf]
    %v243 = vld [vmem:[#allocation4] sm:$0xf]
    %v244 = vld [vmem:[%s181] sm:$0xf]
    %v245 = vsub.f32 %v243, %v244
    %v246 = vsub.f32 %v242, %v241
    %v247 = vmul.f32 %v241, 1.442695
    %v248 = vpow.pop %v247
    %v249 = vmul.f32 %v245, %v245
    %v250 = vadd.f32 %v248, %v249
    %v251 = vsub.f32 0.0, %v242
    %v252 = vmul.f32 %v251, 1.442695
    %v253 = vpow.pop %v252
    %v254 = vmul.f32 %v250, %v253
    %v255 = vadd.f32 %v246, %v254
    %v256 = vsub.f32 %v255, 1.0
    %v257 = vld [vmem:[%s231] sm:$0xf]
    %v258 = vld [vmem:[%s221] sm:$0xf]
    %v259 = vmul.f32 %v258, 0.5
    %v260 = vmul.f32 %v259, %v257
    %v261 = vld [vmem:[%s201] sm:$0xf]
    %v262 = vld [vmem:[%s211] sm:$0xf]
    %v263 = vsub.f32 %v261, %v262
    %v264 = vmul.f32 %v257, %v263
    %v265 = vmul.f32 %v264, %v264
    %v266 = vsub.f32 0.0, %v260
    %v267 = vmul.f32 %v266, 1.442695
    %v268 = vpow.pop %v267
    %v269 = vmul.f32 %v265, %v268
    %v270 = vadd.f32 %v260, %v269
    %v271 = vld [vmem:[#allocation2] sm:$0x1]
    %vm272 = vcmask 1043456
    %v273 = vsel %vm272, %v256, 0.0
    %274 = vadd.xlane.f32.xlu0 %v273
    %v275 = vpop.xlane.xlu0 %274
    %v276 = vrot.slane %v275, 4
    %v277 = vadd.f32 %v275, %v276
    %v278 = vrot.slane %v277, 2
    %v279 = vadd.f32 %v277, %v278
    %v280 = vrot.slane %v279, 1
    %v281 = vadd.f32 %v279, %v280
    %s282 = vtos %v281
    %v283 = vstv %s282
    %v284 = vadd.f32 %v271, %v283
    %285 = vst [vmem:[#allocation2] sm:$0x1] %v284
    %v286 = vld [vmem:[#allocation3] sm:$0x1]
    %v287 = vsel %vm272, %v270, 0.0
    %288 = vadd.xlane.f32.xlu0 %v287
    %v289 = vpop.xlane.xlu0 %288
    %v290 = vrot.slane %v289, 4
    %v291 = vadd.f32 %v289, %v290
    %v292 = vrot.slane %v291, 2
    %v293 = vadd.f32 %v291, %v292
    %v294 = vrot.slane %v293, 1
    %v295 = vadd.f32 %v293, %v294
    %s296 = vtos %v295
    %v297 = vstv %s296
    %v298 = vadd.f32 %v286, %v297
    %299 = vst [vmem:[#allocation3] sm:$0x1] %v298
    // Predicated region
    $region46: #{tpu_custom_call.1} parent=1 // pred_check
      %p300 = pneg %p235
    $region47: #{tpu_custom_call.1} parent=1 // pred_check_branch
      %302 = sbr.rel (%p300) target = $region49
    $region48: #{tpu_custom_call.1} parent=1 // pred_region
      %v303 = vld [vmem:[#allocation2] sm:$0x1]
      %304 = vst [vmem:[#allocation9] sm:$0x1] %v303
      %v305 = vld [vmem:[#allocation3] sm:$0x1]
      %306 = vst [vmem:[#allocation10] sm:$0x1] %v305
    $region49: #{tpu_custom_call.1} parent=1 // pred_fallthru
      _
    // Predicated region
    $region50: #{tpu_custom_call.1} parent=1 // pred_check
      _
    $region51: #{tpu_custom_call.1} parent=1 // pred_check_branch
      %308 = sbr.rel (0) target = $region53
    $region52: #{tpu_custom_call.1} parent=1 // pred_region
      %s310 = ssub.s32 16, 16
      %311 = vsyncadd [#allocation6], %s310
      %s313 = sshll.u32 [#allocation9], 4
      %s314 = int_to_ptr.vmem [resolvable:$true] %s313
      %316 = dma.vmem_to_hbm [thread:$0]  %s314, 16, %s8, [#allocation6]
    $region53: #{tpu_custom_call.1} parent=1 // pred_fallthru
      _
    // Predicated region
    $region54: #{tpu_custom_call.1} parent=1 // pred_check
      _
    $region55: #{tpu_custom_call.1} parent=1 // pred_check_branch
      %318 = sbr.rel (0) target = $region57
    $region56: #{tpu_custom_call.1} parent=1 // pred_region
      %s320 = ssub.s32 16, 16
      %321 = vsyncadd [#allocation11], %s320
      %s323 = sshll.u32 [#allocation10], 4
      %s324 = int_to_ptr.vmem [resolvable:$true] %s323
      %326 = dma.vmem_to_hbm [thread:$0]  %s324, 16, %s9, [#allocation11]
    $region57: #{tpu_custom_call.1} parent=1 // pred_fallthru
      _
    // Predicated region
    $region58: #{tpu_custom_call.1} parent=1 // pred_check
      _
    $region59: #{tpu_custom_call.1} parent=1 // pred_check_branch
      %328 = sbr.rel (0) target = $region61
    $region60: #{tpu_custom_call.1} parent=1 // pred_region
      %329 = dma.done [#allocation6], 16
    $region61: #{tpu_custom_call.1} parent=1 // pred_fallthru
      _
    // Predicated region
    $region62: #{tpu_custom_call.1} parent=1 // pred_check
      _
    $region63: #{tpu_custom_call.1} parent=1 // pred_check_branch
      %331 = sbr.rel (0) target = $region65
    $region64: #{tpu_custom_call.1} parent=1 // pred_region
      %332 = dma.done [#allocation11], 16
    $region65: #{tpu_custom_call.1} parent=1 // pred_fallthru
      _
    %333 = vsyncpa [#allocation5], 1
    %334 = vsyncpa [#allocation8], 1
    %335 = vsyncpa [#allocation6], 1
    %336 = vsyncpa [#allocation11], 1

</llo_original>
